<compile_context>
chip_gen: v7x
topology: tpu7x:2x2x1
jax: 0.10.0
libtpu: 0.0.40
codegen_flags: <defaults>
</compile_context>

<pallas_src>
import jax
import jax.numpy as jnp
from jax.experimental import pallas as pl
from jax.experimental.pallas import tpu as pltpu


def _reparam_kernel(x_ref, eps_ref, z_ref):
    """Elementwise VAE reparameterization.

    encode is identity, so mu = x and logvar = x; decode is identity, so the
    kernel only needs to emit z = mu + eps * exp(0.5 * logvar).
    """
    x = x_ref[...]
    std = jnp.exp(0.5 * x)              # std = exp(0.5 * logvar), logvar = x
    z_ref[...] = x + eps_ref[...] * std  # z = mu + eps * std, mu = x


_COLS = 1024          # lane-dense last dim (multiple of 128) -> unmasked full-lane vst
_MAX_TILE_ROWS = 512  # 512 * 1024 * 4 B = 2 MiB per array tile; 3 arrays x 2 buffers
                      # = 12 MiB, safely inside v7x's 32 MiB scoped VMEM default.


def base_vae_forward(x, seed=0):
    """BaseVAE.forward: returns (x_hat, z, mu, logvar), all NCHW like PyTorch."""
    B, C, H, W = x.shape
    x = x.astype(jnp.float32)

    # TODO(synk): BaseEncoder defines no forward(); encode modeled as identity
    # producing (mu, logvar) = (x, x).
    mu = x
    logvar = x

    # Flatten to a lane-dense 2-D slab and pad so the row dim tiles cleanly.
    n = B * C * H * W
    rows = pl.cdiv(n, _COLS)
    if rows >= _MAX_TILE_ROWS:
        tile_rows = _MAX_TILE_ROWS
    else:
        tile_rows = max(8, pl.cdiv(rows, 8) * 8)   # keep sublane dim a multiple of 8
    rows_pad = pl.cdiv(rows, tile_rows) * tile_rows
    n_pad = rows_pad * _COLS

    x2 = jnp.pad(x.reshape(-1), (0, n_pad - n)).reshape(rows_pad, _COLS)

    # eps ~ N(0, 1), matching torch.randn_like (same distribution, different
    # stream).
    # TODO(synk): in-kernel pltpu.prng_* sampling is TPU-Mosaic-only (no
    # interpret/CPU lowering), so eps is drawn with jax.random outside the
    # kernel and streamed in.
    eps2 = jax.random.normal(
        jax.random.PRNGKey(seed), (rows_pad, _COLS), dtype=jnp.float32
    )

    grid = (rows_pad // tile_rows,)
    z2 = pl.pallas_call(
        _reparam_kernel,
        out_shape=jax.ShapeDtypeStruct((rows_pad, _COLS), jnp.float32),
        grid=grid,
        in_specs=[
            pl.BlockSpec((tile_rows, _COLS), lambda i: (i, 0)),   # x tile
            pl.BlockSpec((tile_rows, _COLS), lambda i: (i, 0)),   # eps tile
        ],
        out_specs=pl.BlockSpec((tile_rows, _COLS), lambda i: (i, 0)),  # z tile
        compiler_params=pltpu.CompilerParams(
            dimension_semantics=("parallel",),  # independent tiles -> v7x megacore
        ),
    )(x2, eps2)

    z = z2.reshape(-1)[:n].reshape(B, C, H, W)
    # TODO(synk): BaseDecoder defines no forward(); decode modeled as identity.
    x_hat = z
    return x_hat, z, mu, logvar


if __name__ == "__main__":
    key = jax.random.PRNGKey(0)
    x = jax.random.normal(key, (2, 4, 16, 16), dtype=jnp.float32)

    x_hat, z, mu, logvar = base_vae_forward(x, seed=0)
    jax.block_until_ready((x_hat, z, mu, logvar))

    assert x_hat.shape == x.shape
    assert z.shape == x.shape
    assert mu.shape == x.shape
    assert logvar.shape == x.shape
    assert bool(jnp.all(jnp.isfinite(z)))
    assert bool(jnp.all(jnp.isfinite(x_hat)))
    # z must equal mu + eps * exp(0.5 * logvar) for the generated eps stream.
    eps_ref = jax.random.normal(
        jax.random.PRNGKey(0), (8, 1024), dtype=jnp.float32
    ).reshape(-1)[: x.size].reshape(x.shape)
    z_ref = mu + eps_ref * jnp.exp(0.5 * logvar)
    assert bool(jnp.allclose(z, z_ref, rtol=1e-6, atol=1e-6))

    print("KERNEL_OK")
</pallas_src>

<mosaic_0001>
module attributes {stable_mosaic.version = 11 : i64} {
  func.func @_reparam_kernel(%arg0: i32, %arg1: memref<8x1024xf32, #tpu.memory_space<vmem>>, %arg2: memref<8x1024xf32, #tpu.memory_space<vmem>>, %arg3: memref<8x1024xf32, #tpu.memory_space<vmem>>) attributes {dimension_semantics = [#tpu.dimension_semantics<parallel>], iteration_bounds = array<i64: 1>, scalar_prefetch = 0 : i64, scratch_operands = 0 : i64, tpu.core_type = #tpu.core_type<tc>, window_params = [{transform_indices = @transform_0, window_bounds = array<i64: 8, 1024>}, {transform_indices = @transform_1, window_bounds = array<i64: 8, 1024>}, {transform_indices = @transform_2, window_bounds = array<i64: 8, 1024>}]} {
    %c0 = arith.constant 0 : index
    %c0_0 = arith.constant 0 : index
    %0 = vector.load %arg1[%c0, %c0_0] : memref<8x1024xf32, #tpu.memory_space<vmem>>, vector<8x1024xf32>
    %cst = arith.constant 5.000000e-01 : f32
    %1 = vector.broadcast %cst : f32 to vector<8x1024xf32>
    %2 = arith.mulf %1, %0 : vector<8x1024xf32>
    %3 = math.exp %2 : vector<8x1024xf32>
    %c0_1 = arith.constant 0 : index
    %c0_2 = arith.constant 0 : index
    %4 = vector.load %arg2[%c0_1, %c0_2] : memref<8x1024xf32, #tpu.memory_space<vmem>>, vector<8x1024xf32>
    %5 = arith.mulf %4, %3 : vector<8x1024xf32>
    %6 = arith.addf %0, %5 : vector<8x1024xf32>
    %c0_3 = arith.constant 0 : index
    %c0_4 = arith.constant 0 : index
    %7 = vector.load %arg3[%c0_3, %c0_4] : memref<8x1024xf32, #tpu.memory_space<vmem>>, vector<8x1024xf32>
    tpu.vector_store %arg3[%c0_3, %c0_4], %6 {strides = array<i32>} : memref<8x1024xf32, #tpu.memory_space<vmem>>, vector<8x1024xf32>,
    return
  }
  func.func @transform_0(%arg0: i32) -> (i32, i32) {
    %c0_i32 = arith.constant 0 : i32
    %c0_i32_0 = arith.constant 0 : i32
    return %arg0, %c0_i32 : i32, i32
  }
  func.func @transform_1(%arg0: i32) -> (i32, i32) {
    %c0_i32 = arith.constant 0 : i32
    %c0_i32_0 = arith.constant 0 : i32
    return %arg0, %c0_i32 : i32, i32
  }
  func.func @transform_2(%arg0: i32) -> (i32, i32) {
    %c0_i32 = arith.constant 0 : i32
    %c0_i32_0 = arith.constant 0 : i32
    return %arg0, %c0_i32 : i32, i32
  }
}

</mosaic_0001>

<llo_original>
// kernel: tpu_custom_call.1
$region0: #{tpu_custom_call.1}
  #allocation0 [shape = 'u32[]', space=smem, size = 0x4, offset = 0x4, fixed_abs, tag = 'smem constant byte address 0x4 - core index']
  #allocation1 [shape = 'u32[144,128]{1,0:T(1,128)}', space=vmem, size = 0x12000, scoped, tag = 'internal scratch']
  %s0 = inlined_call_operand.hbm [shape: f32[8,1024], index: 0, kind: input, shape index: {}]
  %s1 = inlined_call_operand.hbm [shape: f32[8,1024], index: 1, kind: input, shape index: {}]
  %s2 = inlined_call_operand.hbm [shape: f32[8,1024], index: 2, kind: output, shape index: {}]
  %s3 = sld [smem:[#allocation0]]
  $region26: #{tpu_custom_call.1} parent=0
    _
  %s5 = ssub.s32 1, %s3
  %s6 = scalar_select 0, %s5, %s3
  $region1: #{tpu_custom_call.1} parent=0
    #allocation2 [shape = 'u8[32768]{0}', space=vmem, size = 0x8000, scoped, tag = 'input window, operand 0, single buffered']
    #allocation3 [shape = 's32[1]{0}', space=sflag, size = 0x4, scoped, tag = 'scoped memory for tpu_custom_call.1']
    #allocation4 [shape = 's32[1]{0}', space=sflag, size = 0x4, scoped, tag = 'scoped memory for tpu_custom_call.1']
    #allocation5 [shape = 'u8[32768]{0}', space=vmem, size = 0x8000, scoped, tag = 'input window, operand 1, single buffered']
    #allocation6 [shape = 's32[1]{0}', space=sflag, size = 0x4, scoped, tag = 'scoped memory for tpu_custom_call.1']
    #allocation7 [shape = 'u8[32768]{0}', space=vmem, size = 0x8000, scoped, tag = 'output window, operand 0, single buffered']
    %7 = vsyncpa [#allocation3], 0
    %8 = vsyncpa [#allocation6], 0
    %9 = vsyncpa [#allocation4], 0
    // Predicated region
    $region2: #{tpu_custom_call.1} parent=1 // pred_check
      _
    $region3: #{tpu_custom_call.1} parent=1 // pred_check_branch
      %11 = sbr.rel (0) target = $region5
    $region4: #{tpu_custom_call.1} parent=1 // pred_region
      %s13 = ssub.s32 1024, 1024
      %14 = vsyncadd [#allocation3], %s13
      %s16 = sshll.u32 [#allocation2], 4
      %s17 = int_to_ptr.vmem [resolvable:$true] %s16
      %19 = dma.hbm_to_vmem [thread:$0]  %s0, 1024, %s17, [#allocation3]
    $region5: #{tpu_custom_call.1} parent=1 // pred_fallthru
      _
    // Predicated region
    $region6: #{tpu_custom_call.1} parent=1 // pred_check
      _
    $region7: #{tpu_custom_call.1} parent=1 // pred_check_branch
      %21 = sbr.rel (0) target = $region9
    $region8: #{tpu_custom_call.1} parent=1 // pred_region
      %s23 = ssub.s32 1024, 1024
      %24 = vsyncadd [#allocation6], %s23
      %s26 = sshll.u32 [#allocation5], 4
      %s27 = int_to_ptr.vmem [resolvable:$true] %s26
      %29 = dma.hbm_to_vmem [thread:$0]  %s1, 1024, %s27, [#allocation6]
    $region9: #{tpu_custom_call.1} parent=1 // pred_fallthru
      _
    // Predicated region
    $region10: #{tpu_custom_call.1} parent=1 // pred_check
      _
    $region11: #{tpu_custom_call.1} parent=1 // pred_check_branch
      %31 = sbr.rel (0) target = $region13
    $region12: #{tpu_custom_call.1} parent=1 // pred_region
      %32 = dma.done [#allocation3], 1024
    $region13: #{tpu_custom_call.1} parent=1 // pred_fallthru
      _
    // Predicated region
    $region14: #{tpu_custom_call.1} parent=1 // pred_check
      _
    $region15: #{tpu_custom_call.1} parent=1 // pred_check_branch
      %34 = sbr.rel (0) target = $region17
    $region16: #{tpu_custom_call.1} parent=1 // pred_region
      %35 = dma.done [#allocation6], 1024
    $region17: #{tpu_custom_call.1} parent=1 // pred_fallthru
      _
    %v36 = vld [vmem:[#allocation2] sm:$0xff]
    %v37 = vld [vmem:[#allocation2 + $0x8] sm:$0xff]
    %v38 = vld [vmem:[#allocation2 + $0x10] sm:$0xff]
    %v39 = vld [vmem:[#allocation2 + $0x18] sm:$0xff]
    %v40 = vld [vmem:[#allocation2 + $0x20] sm:$0xff]
    %v41 = vld [vmem:[#allocation2 + $0x28] sm:$0xff]
    %v42 = vld [vmem:[#allocation2 + $0x30] sm:$0xff]
    %v43 = vld [vmem:[#allocation2 + $0x38] sm:$0xff]
    %v44 = vmul.f32 %v36, 0.5
    %v45 = vmul.f32 %v37, 0.5
    %v46 = vmul.f32 %v38, 0.5
    %v47 = vmul.f32 %v39, 0.5
    %v48 = vmul.f32 %v40, 0.5
    %v49 = vmul.f32 %v41, 0.5
    %v50 = vmul.f32 %v42, 0.5
    %v51 = vmul.f32 %v43, 0.5
    %v52 = vmul.f32 %v44, 1.442695
    %v53 = vpow.pop %v52
    %v54 = vmul.f32 %v45, 1.442695
    %v55 = vpow.pop %v54
    %v56 = vmul.f32 %v46, 1.442695
    %v57 = vpow.pop %v56
    %v58 = vmul.f32 %v47, 1.442695
    %v59 = vpow.pop %v58
    %v60 = vmul.f32 %v48, 1.442695
    %v61 = vpow.pop %v60
    %v62 = vmul.f32 %v49, 1.442695
    %v63 = vpow.pop %v62
    %v64 = vmul.f32 %v50, 1.442695
    %v65 = vpow.pop %v64
    %v66 = vmul.f32 %v51, 1.442695
    %v67 = vpow.pop %v66
    %v68 = vld [vmem:[#allocation5] sm:$0xff]
    %v69 = vld [vmem:[#allocation5 + $0x8] sm:$0xff]
    %v70 = vld [vmem:[#allocation5 + $0x10] sm:$0xff]
    %v71 = vld [vmem:[#allocation5 + $0x18] sm:$0xff]
    %v72 = vld [vmem:[#allocation5 + $0x20] sm:$0xff]
    %v73 = vld [vmem:[#allocation5 + $0x28] sm:$0xff]
    %v74 = vld [vmem:[#allocation5 + $0x30] sm:$0xff]
    %v75 = vld [vmem:[#allocation5 + $0x38] sm:$0xff]
    %v76 = vmul.f32 %v68, %v53
    %v77 = vmul.f32 %v69, %v55
    %v78 = vmul.f32 %v70, %v57
    %v79 = vmul.f32 %v71, %v59
    %v80 = vmul.f32 %v72, %v61
    %v81 = vmul.f32 %v73, %v63
    %v82 = vmul.f32 %v74, %v65
    %v83 = vmul.f32 %v75, %v67
    %v84 = vadd.f32 %v36, %v76
    %v85 = vadd.f32 %v37, %v77
    %v86 = vadd.f32 %v38, %v78
    %v87 = vadd.f32 %v39, %v79
    %v88 = vadd.f32 %v40, %v80
    %v89 = vadd.f32 %v41, %v81
    %v90 = vadd.f32 %v42, %v82
    %v91 = vadd.f32 %v43, %v83
    %92 = vst [vmem:[#allocation7] sm:$0xff] %v84
    %93 = vst [vmem:[#allocation7 + $0x8] sm:$0xff] %v85
    %94 = vst [vmem:[#allocation7 + $0x10] sm:$0xff] %v86
    %95 = vst [vmem:[#allocation7 + $0x18] sm:$0xff] %v87
    %96 = vst [vmem:[#allocation7 + $0x20] sm:$0xff] %v88
    %97 = vst [vmem:[#allocation7 + $0x28] sm:$0xff] %v89
    %98 = vst [vmem:[#allocation7 + $0x30] sm:$0xff] %v90
    %99 = vst [vmem:[#allocation7 + $0x38] sm:$0xff] %v91
    // Predicated region
    $region18: #{tpu_custom_call.1} parent=1 // pred_check
      _
    $region19: #{tpu_custom_call.1} parent=1 // pred_check_branch
      %101 = sbr.rel (0) target = $region21
    $region20: #{tpu_custom_call.1} parent=1 // pred_region
      %s103 = ssub.s32 1024, 1024
      %104 = vsyncadd [#allocation4], %s103
      %s106 = sshll.u32 [#allocation7], 4
      %s107 = int_to_ptr.vmem [resolvable:$true] %s106
      %109 = dma.vmem_to_hbm [thread:$0]  %s107, 1024, %s2, [#allocation4]
    $region21: #{tpu_custom_call.1} parent=1 // pred_fallthru
      _
    // Predicated region
    $region22: #{tpu_custom_call.1} parent=1 // pred_check
      _
    $region23: #{tpu_custom_call.1} parent=1 // pred_check_branch
      %111 = sbr.rel (0) target = $region25
    $region24: #{tpu_custom_call.1} parent=1 // pred_region
      %112 = dma.done [#allocation4], 1024
    $region25: #{tpu_custom_call.1} parent=1 // pred_fallthru
      _
    %113 = vsyncpa [#allocation3], 1
    %114 = vsyncpa [#allocation6], 1
    %115 = vsyncpa [#allocation4], 1

</llo_original>
